<compile_context>
chip_gen: v5e
topology: v5e:2x2
jax: 0.10.0
libtpu: 0.0.40
codegen_flags: <defaults>
</compile_context>

<pallas_src>
import jax
import jax.numpy as jnp
from jax import lax
from jax.experimental import pallas as pl
from jax.experimental.pallas import tpu as pltpu


MAX_VAR = 0.1
MIN_VARIANCE = 1e-5
SIGMOID_COEFF = 1.0


def _round_up(x, m):
    return ((x + m - 1) // m) * m


def nn_forward_kernel(x_ref, w1_ref, b1_ref, w2_ref, b2_ref, out_ref):
    # Layer 1: (TB, n_in) @ (n_in, n_hidden) on the MXU, f32 accumulate.
    h = jnp.dot(x_ref[...], w1_ref[...], preferred_element_type=jnp.float32)
    # Bias + ReLU epilogue kept in f32 (VPU; v5e has no bf16 VPU).
    h = jnp.maximum(h + b1_ref[...], 0.0)

    # Head: (TB, n_hidden) @ (n_hidden, 2) on the MXU, f32 accumulate.
    out = jnp.dot(h.astype(w2_ref.dtype), w2_ref[...],
                  preferred_element_type=jnp.float32) + b2_ref[...]

    # Fused sigmoid head: column 0 -> mean, column 1 -> variance.
    # Built from in-kernel iota + scalar constants (no captured array consts).
    s = jax.nn.sigmoid(out)
    col = lax.broadcasted_iota(jnp.int32, s.shape, 1)
    is_mean = col == 0
    scale = jnp.where(is_mean, jnp.float32(SIGMOID_COEFF), jnp.float32(MAX_VAR))
    shift = jnp.where(is_mean, jnp.float32(0.0), jnp.float32(MIN_VARIANCE))
    out_ref[...] = s * scale + shift


def nn_forward(x, w1, b1, w2, b2, *, batch_tile=None, matmul_dtype=None):
    """x: (B, n_inputs) f32. Weights stored transposed vs. torch:
    w1 (n_inputs, n_hidden), b1 (1, n_hidden), w2 (n_hidden, 2), b2 (1, 2).
    Returns (mean, variance), each shape (B,) f32."""
    B, n_in = x.shape
    n_hidden = w1.shape[1]

    if matmul_dtype is not None:
        # bf16 MXU operands (halves HBM traffic / VMEM for x and weights);
        # biases and the whole epilogue stay f32.
        x = x.astype(matmul_dtype)
        w1 = w1.astype(matmul_dtype)
        w2 = w2.astype(matmul_dtype)
    b1 = b1.astype(jnp.float32).reshape(1, n_hidden)
    b2 = b2.astype(jnp.float32).reshape(1, 2)

    # Batch tile: as large as practical (per-grid-step overhead ~0.35us, small
    # tiles waste bandwidth), aligned for the dtype's sublane packing.
    align = 16 if x.dtype == jnp.bfloat16 else 8
    if batch_tile is None:
        batch_tile = 1024
    tb = _round_up(min(batch_tile, _round_up(B, align)), align)
    padded_B = _round_up(B, tb)
    if padded_B != B:
        x = jnp.pad(x, ((0, padded_B - B), (0, 0)))
    grid = (padded_B // tb,)

    out2 = pl.pallas_call(
        nn_forward_kernel,
        out_shape=jax.ShapeDtypeStruct((padded_B, 2), jnp.float32),
        grid=grid,
        in_specs=[
            # x streamed per batch tile (double-buffered DMA overlaps the matmul).
            pl.BlockSpec((tb, n_in), lambda i: (i, 0)),
            # Weights / biases: constant block index -> fetched once, VMEM-resident.
            pl.BlockSpec((n_in, n_hidden), lambda i: (0, 0)),
            pl.BlockSpec((1, n_hidden), lambda i: (0, 0)),
            pl.BlockSpec((n_hidden, 2), lambda i: (0, 0)),
            pl.BlockSpec((1, 2), lambda i: (0, 0)),
        ],
        out_specs=pl.BlockSpec((tb, 2), lambda i: (i, 0)),
        compiler_params=pltpu.CompilerParams(
            dimension_semantics=("parallel",),  # megacore-shard the batch grid (v7x)
        ),
    )(x, w1, b1, w2, b2)

    mean = out2[:B, 0]
    var = out2[:B, 1]
    return mean, var


def init_params(key, n_inputs, n_hidden):
    """Deterministic init matching torch.nn.Linear's default uniform(-1/sqrt(fan_in), ...)."""
    k1, k2, k3, k4 = jax.random.split(key, 4)
    lim1 = 1.0 / jnp.sqrt(jnp.float32(n_inputs))
    lim2 = 1.0 / jnp.sqrt(jnp.float32(n_hidden))
    w1 = jax.random.uniform(k1, (n_inputs, n_hidden), jnp.float32, -lim1, lim1)
    b1 = jax.random.uniform(k2, (1, n_hidden), jnp.float32, -lim1, lim1)
    w2 = jax.random.uniform(k3, (n_hidden, 2), jnp.float32, -lim2, lim2)
    b2 = jax.random.uniform(k4, (1, 2), jnp.float32, -lim2, lim2)
    return w1, b1, w2, b2


def reference_forward(x, w1, b1, w2, b2):
    h = jnp.maximum(x @ w1 + b1, 0.0)
    out = h @ w2 + b2
    mean = jax.nn.sigmoid(out[:, 0]) * SIGMOID_COEFF
    var = jax.nn.sigmoid(out[:, 1]) * MAX_VAR + MIN_VARIANCE
    return mean, var


if __name__ == "__main__":
    B, n_inputs, n_hidden = 8, 16, 32
    key = jax.random.PRNGKey(0)
    kx, kx2, kp = jax.random.split(key, 3)
    x = jax.random.normal(kx, (B, n_inputs), jnp.float32)
    w1, b1, w2, b2 = init_params(kp, n_inputs, n_hidden)

    # 1) f32 path, single batch tile.
    mean, var = nn_forward(x, w1, b1, w2, b2)
    jax.block_until_ready((mean, var))
    mean_ref, var_ref = reference_forward(x, w1, b1, w2, b2)
    assert mean.shape == (B,) and var.shape == (B,)
    assert jnp.allclose(mean, mean_ref, atol=1e-5, rtol=1e-5)
    assert jnp.allclose(var, var_ref, atol=1e-6, rtol=1e-5)

    # 2) Multi-tile path (grid > 1, with batch padding) to exercise the pipeline.
    B2 = 40
    x2 = jax.random.normal(kx2, (B2, n_inputs), jnp.float32)
    mean2, var2 = nn_forward(x2, w1, b1, w2, b2, batch_tile=16)
    jax.block_until_ready((mean2, var2))
    mr2, vr2 = reference_forward(x2, w1, b1, w2, b2)
    assert mean2.shape == (B2,) and var2.shape == (B2,)
    assert jnp.allclose(mean2, mr2, atol=1e-5, rtol=1e-5)
    assert jnp.allclose(var2, vr2, atol=1e-6, rtol=1e-5)

    # 3) bf16-MXU path (f32 accumulate + f32 epilogue); looser tolerances.
    mean3, var3 = nn_forward(x2, w1, b1, w2, b2, batch_tile=16,
                             matmul_dtype=jnp.bfloat16)
    jax.block_until_ready((mean3, var3))
    assert jnp.allclose(mean3, mr2, atol=2e-2, rtol=2e-2)
    assert jnp.allclose(var3, vr2, atol=2e-3, rtol=2e-2)

    print("KERNEL_OK")
</pallas_src>

<mosaic_0001>
module attributes {stable_mosaic.version = 11 : i64} {
  func.func @nn_forward_kernel(%arg0: i32, %arg1: memref<8x16xf32, #tpu.memory_space<vmem>>, %arg2: memref<16x32xf32, #tpu.memory_space<vmem>>, %arg3: memref<1x32xf32, #tpu.memory_space<vmem>>, %arg4: memref<32x2xf32, #tpu.memory_space<vmem>>, %arg5: memref<1x2xf32, #tpu.memory_space<vmem>>, %arg6: memref<8x2xf32, #tpu.memory_space<vmem>>) attributes {dimension_semantics = [#tpu.dimension_semantics<parallel>], iteration_bounds = array<i64: 1>, scalar_prefetch = 0 : i64, scratch_operands = 0 : i64, tpu.core_type = #tpu.core_type<tc>, window_params = [{transform_indices = @transform_0, window_bounds = array<i64: 8, 16>}, {pipeline_mode = #tpu.pipeline_mode<synchronous>, transform_indices = @transform_1, window_bounds = array<i64: 16, 32>}, {pipeline_mode = #tpu.pipeline_mode<synchronous>, transform_indices = @transform_2, window_bounds = array<i64: 1, 32>}, {pipeline_mode = #tpu.pipeline_mode<synchronous>, transform_indices = @transform_3, window_bounds = array<i64: 32, 2>}, {pipeline_mode = #tpu.pipeline_mode<synchronous>, transform_indices = @transform_4, window_bounds = array<i64: 1, 2>}, {transform_indices = @transform_5, window_bounds = array<i64: 8, 2>}]} {
    %c0 = arith.constant 0 : index
    %c0_0 = arith.constant 0 : index
    %0 = vector.load %arg1[%c0, %c0_0] : memref<8x16xf32, #tpu.memory_space<vmem>>, vector<8x16xf32>
    %c0_1 = arith.constant 0 : index
    %c0_2 = arith.constant 0 : index
    %1 = vector.load %arg2[%c0_1, %c0_2] : memref<16x32xf32, #tpu.memory_space<vmem>>, vector<16x32xf32>
    %cst = arith.constant dense<0.000000e+00> : vector<8x32xf32>
    %2 = tpu.matmul %0, %1, %cst {dimension_numbers = #tpu.dot_dimension_numbers<[1], [0], [0], [1], [0, 0, 1, 1], [], []>} : vector<8x16xf32>, vector<16x32xf32>, vector<8x32xf32> -> vector<8x32xf32>
    %c0_3 = arith.constant 0 : index
    %c0_4 = arith.constant 0 : index
    %3 = vector.load %arg3[%c0_3, %c0_4] : memref<1x32xf32, #tpu.memory_space<vmem>>, vector<1x32xf32>
    %4 = vector.broadcast %3 : vector<1x32xf32> to vector<8x32xf32>
    %5 = arith.addf %2, %4 : vector<8x32xf32>
    %cst_5 = arith.constant 0.000000e+00 : f32
    %6 = vector.broadcast %cst_5 : f32 to vector<8x32xf32>
    %7 = arith.maximumf %5, %6 : vector<8x32xf32>
    %c0_6 = arith.constant 0 : index
    %c0_7 = arith.constant 0 : index
    %8 = vector.load %arg4[%c0_6, %c0_7] : memref<32x2xf32, #tpu.memory_space<vmem>>, vector<32x2xf32>
    %cst_8 = arith.constant dense<0.000000e+00> : vector<8x2xf32>
    %9 = tpu.matmul %7, %8, %cst_8 {dimension_numbers = #tpu.dot_dimension_numbers<[1], [0], [0], [1], [0, 0, 1, 1], [], []>} : vector<8x32xf32>, vector<32x2xf32>, vector<8x2xf32> -> vector<8x2xf32>
    %c0_9 = arith.constant 0 : index
    %c0_10 = arith.constant 0 : index
    %10 = vector.load %arg5[%c0_9, %c0_10] : memref<1x2xf32, #tpu.memory_space<vmem>>, vector<1x2xf32>
    %11 = vector.broadcast %10 : vector<1x2xf32> to vector<8x2xf32>
    %12 = arith.addf %9, %11 : vector<8x2xf32>
    %13 = arith.negf %12 : vector<8x2xf32>
    %14 = math.exp %13 : vector<8x2xf32>
    %cst_11 = arith.constant 1.000000e+00 : f32
    %15 = vector.broadcast %cst_11 : f32 to vector<8x2xf32>
    %16 = arith.addf %15, %14 : vector<8x2xf32>
    %17 = arith.divf %15, %16 : vector<8x2xf32>
    %18 = tpu.iota {dimensions = array<i32: 1>} : vector<8x2xi32>
    %c0_i32 = arith.constant 0 : i32
    %19 = vector.broadcast %c0_i32 : i32 to vector<8x2xi32>
    %20 = arith.cmpi eq, %18, %19 : vector<8x2xi32>
    %cst_12 = arith.constant 1.000000e+00 : f32
    %cst_13 = arith.constant 1.000000e-01 : f32
    %21 = vector.broadcast %cst_12 : f32 to vector<8x2xf32>
    %22 = vector.broadcast %cst_13 : f32 to vector<8x2xf32>
    %23 = arith.select %20, %21, %22 : vector<8x2xi1>, vector<8x2xf32>
    %cst_14 = arith.constant 0.000000e+00 : f32
    %cst_15 = arith.constant 9.99999974E-6 : f32
    %24 = vector.broadcast %cst_14 : f32 to vector<8x2xf32>
    %25 = vector.broadcast %cst_15 : f32 to vector<8x2xf32>
    %26 = arith.select %20, %24, %25 : vector<8x2xi1>, vector<8x2xf32>
    %27 = arith.mulf %17, %23 : vector<8x2xf32>
    %28 = arith.addf %27, %26 : vector<8x2xf32>
    %c0_16 = arith.constant 0 : index
    %c0_17 = arith.constant 0 : index
    %29 = vector.load %arg6[%c0_16, %c0_17] : memref<8x2xf32, #tpu.memory_space<vmem>>, vector<8x2xf32>
    tpu.vector_store %arg6[%c0_16, %c0_17], %28 {strides = array<i32>} : memref<8x2xf32, #tpu.memory_space<vmem>>, vector<8x2xf32>,
    return
  }
  func.func @transform_0(%arg0: i32) -> (i32, i32) {
    %c0_i32 = arith.constant 0 : i32
    %c0_i32_0 = arith.constant 0 : i32
    return %arg0, %c0_i32 : i32, i32
  }
  func.func @transform_1(%arg0: i32) -> (i32, i32) {
    %c0_i32 = arith.constant 0 : i32
    %c0_i32_0 = arith.constant 0 : i32
    %c0_i32_1 = arith.constant 0 : i32
    return %c0_i32, %c0_i32_0 : i32, i32
  }
  func.func @transform_2(%arg0: i32) -> (i32, i32) {
    %c0_i32 = arith.constant 0 : i32
    %c0_i32_0 = arith.constant 0 : i32
    %c0_i32_1 = arith.constant 0 : i32
    return %c0_i32, %c0_i32_0 : i32, i32
  }
  func.func @transform_3(%arg0: i32) -> (i32, i32) {
    %c0_i32 = arith.constant 0 : i32
    %c0_i32_0 = arith.constant 0 : i32
    %c0_i32_1 = arith.constant 0 : i32
    return %c0_i32, %c0_i32_0 : i32, i32
  }
  func.func @transform_4(%arg0: i32) -> (i32, i32) {
    %c0_i32 = arith.constant 0 : i32
    %c0_i32_0 = arith.constant 0 : i32
    %c0_i32_1 = arith.constant 0 : i32
    return %c0_i32, %c0_i32_0 : i32, i32
  }
  func.func @transform_5(%arg0: i32) -> (i32, i32) {
    %c0_i32 = arith.constant 0 : i32
    %c0_i32_0 = arith.constant 0 : i32
    return %arg0, %c0_i32 : i32, i32
  }
}

</mosaic_0001>

<llo_original>
// kernel: tpu_custom_call.1
$region0: #{tpu_custom_call.1}
  #allocation0 [shape = 'u32[]', space=smem, size = 0x4, offset = 0x4, fixed_abs, tag = 'smem constant byte address 0x4 - core index']
  #allocation1 [shape = 'u32[72,128]{1,0:T(1,128)}', space=vmem, size = 0x9000, scoped, tag = 'internal scratch']
  %s0 = inlined_call_operand.vmem [shape: f32[8,16], index: 0, kind: input, shape index: {}]
  %s1 = inlined_call_operand.vmem [shape: f32[16,32], index: 1, kind: input, shape index: {}]
  %s2 = inlined_call_operand.vmem [shape: f32[1,32], index: 2, kind: input, shape index: {}]
  %s3 = inlined_call_operand.vmem [shape: f32[32,2], index: 3, kind: input, shape index: {}]
  %s4 = inlined_call_operand.vmem [shape: f32[1,2], index: 4, kind: input, shape index: {}]
  %s5 = inlined_call_operand.vmem [shape: f32[8,2], index: 5, kind: output, shape index: {}]
  %s6 = sld [smem:[#allocation0]]
  $region30: #{tpu_custom_call.1} parent=0
    _
  %s8 = ssub.s32 1, %s6
  %s9 = scalar_select 0, %s8, %s6
  // Predicated region
  $region2: #{tpu_custom_call.1} parent=0 // pred_check
    _
  $region3: #{tpu_custom_call.1} parent=0 // pred_check_branch
    %11 = sbr.rel (0) target = $region5
  $region4: #{tpu_custom_call.1} parent=0 // pred_region
    _
  $region5: #{tpu_custom_call.1} parent=0 // pred_fallthru
    _
  // Predicated region
  $region6: #{tpu_custom_call.1} parent=0 // pred_check
    _
  $region7: #{tpu_custom_call.1} parent=0 // pred_check_branch
    %13 = sbr.rel (0) target = $region9
  $region8: #{tpu_custom_call.1} parent=0 // pred_region
    _
  $region9: #{tpu_custom_call.1} parent=0 // pred_fallthru
    _
  // Predicated region
  $region10: #{tpu_custom_call.1} parent=0 // pred_check
    _
  $region11: #{tpu_custom_call.1} parent=0 // pred_check_branch
    %15 = sbr.rel (0) target = $region13
  $region12: #{tpu_custom_call.1} parent=0 // pred_region
    _
  $region13: #{tpu_custom_call.1} parent=0 // pred_fallthru
    _
  // Predicated region
  $region14: #{tpu_custom_call.1} parent=0 // pred_check
    _
  $region15: #{tpu_custom_call.1} parent=0 // pred_check_branch
    %17 = sbr.rel (0) target = $region17
  $region16: #{tpu_custom_call.1} parent=0 // pred_region
    _
  $region17: #{tpu_custom_call.1} parent=0 // pred_fallthru
    _
  // Predicated region
  $region18: #{tpu_custom_call.1} parent=0 // pred_check
    _
  $region19: #{tpu_custom_call.1} parent=0 // pred_check_branch
    %19 = sbr.rel (0) target = $region21
  $region20: #{tpu_custom_call.1} parent=0 // pred_region
    _
  $region21: #{tpu_custom_call.1} parent=0 // pred_fallthru
    _
  %v20 = vld [vmem:[%s0] sm:$0xff]
  %v21 = vld [vmem:[%s1] sm:$0xff]
  %v22 = vld [vmem:[%s1 + $0x8] sm:$0xff]
  %v23 = vld [vmem:[%s2] sm:$0x1]
  %v25 = vperm.slane %v23, 0
  %vm27 = vcmask 130048
  %v29 = vsel %vm27, %v20, 0
  %31 = vmatpush.msra.mxu0 0.0
  %32 = vmatpush.msra.mxu0 0.0
  %33 = vmatpush.msra.mxu0 0.0
  %34 = vmatpush.msra.mxu0 0.0
  %35 = vmatpush.msra.mxu0 0.0
  %36 = vmatpush.msra.mxu0 0.0
  %37 = vmatpush.msra.mxu0 0.0
  %38 = vmatpush.msra.mxu0 0.0
  %39 = vmatpush.msra.mxu0 0.0
  %40 = vmatpush.msra.mxu0 0.0
  %41 = vmatpush.msra.mxu0 0.0
  %42 = vmatpush.msra.mxu0 0.0
  %43 = vmatpush.msra.mxu0 0.0
  %44 = vmatpush.msra.mxu0 0.0
  %45 = vmatpush.msra.mxu0 %v22
  %46 = vmatpush.msra.mxu0 %v21
  %47 = vmatmul.f32.gmra.mxu0 %v29
  %v48 = vpop.f32.mrf.mxu0
  %v49 = vadd.f32 %v25, %v48
  %50 = vdwg.mxu0
  %v51 = vmax.f32 %v49, 0.0
  %v52 = vld [vmem:[%s3] sm:$0xff]
  %v53 = vld [vmem:[%s3 + $0x8] sm:$0xff]
  %v54 = vld [vmem:[%s3 + $0x10] sm:$0xff]
  %v55 = vld [vmem:[%s3 + $0x18] sm:$0xff]
  %v56 = vld [vmem:[%s4] sm:$0x1]
  %v58 = vperm.slane %v56, 0
  %vm60 = vcmask 261120
  %v62 = vsel %vm60, %v51, 0
  %64 = vmatpush.msra.mxu0 0.0
  %65 = vmatpush.msra.mxu0 0.0
  %66 = vmatpush.msra.mxu0 0.0
  %67 = vmatpush.msra.mxu0 0.0
  %68 = vmatpush.msra.mxu0 0.0
  %69 = vmatpush.msra.mxu0 0.0
  %70 = vmatpush.msra.mxu0 0.0
  %71 = vmatpush.msra.mxu0 0.0
  %72 = vmatpush.msra.mxu0 0.0
  %73 = vmatpush.msra.mxu0 0.0
  %74 = vmatpush.msra.mxu0 0.0
  %75 = vmatpush.msra.mxu0 0.0
  %76 = vmatpush.msra.mxu0 %v55
  %77 = vmatpush.msra.mxu0 %v54
  %78 = vmatpush.msra.mxu0 %v53
  %79 = vmatpush.msra.mxu0 %v52
  %80 = vmatmul.f32.gmra.mxu0 %v62
  %v81 = vpop.f32.mrf.mxu0
  %v82 = vadd.f32 %v58, %v81
  %83 = vdwg.mxu0
  %v84 = vxor.u32 %v82, 2147483648
  %v85 = vmul.f32 %v84, 1.442695
  %v86 = vpow.pop %v85
  %v87 = vadd.f32 %v86, 1.0
  %v88 = vrcp.pop %v87
  %v89 = vmul.f32 %v87, %v88
  %v90 = vsub.f32 1.0, %v89
  %v91 = vmul.f32 %v88, %v90
  %v92 = vadd.f32 %v88, %v91
  %vm93 = vweird.f32 %v87
  %vm94 = vweird.f32 %v88
  %vm95 = vmor %vm93, %vm94
  %v96 = vsel %vm95, %v88, %v92
  %v97 = vand.u32 2147483647, %v87
  %vm98 = vcmp.eq.f32.partialorder %v97, 8.507059e+37
  %v99 = vand.u32 %v87, 2147483648
  %v100 = vor.u32 1.1754944e-38, %v99
  %v101 = vsel %vm98, %v100, %v96
  %v102 = vmul.f32 1.0, %v101
  %v103 = vlaneseq
  %v104 = vand.u32 %v103, 127
  %vm105 = vcmp.eq.s32.totalorder %v104, 0
  %v106 = vsel %vm105, 1.0, 0.1
  %v107 = vsel %vm105, 0.0, 1e-05
  %v108 = vmul.f32 %v102, %v106
  %v109 = vadd.f32 %v108, %v107
  %vm110 = vcmask 15360
  %111 = vst.msk [vmem:[%s5] sm:$0xff] %vm110, %v109
  // Predicated region
  $region22: #{tpu_custom_call.1} parent=0 // pred_check
    _
  $region23: #{tpu_custom_call.1} parent=0 // pred_check_branch
    %113 = sbr.rel (0) target = $region25
  $region24: #{tpu_custom_call.1} parent=0 // pred_region
    _
  $region25: #{tpu_custom_call.1} parent=0 // pred_fallthru
    _
  // Predicated region
  $region26: #{tpu_custom_call.1} parent=0 // pred_check
    _
  $region27: #{tpu_custom_call.1} parent=0 // pred_check_branch
    %115 = sbr.rel (0) target = $region29
  $region28: #{tpu_custom_call.1} parent=0 // pred_region
    _
  $region29: #{tpu_custom_call.1} parent=0 // pred_fallthru
    _

</llo_original>
